<compile_context>
chip_gen: v7x
topology: tpu7x:2x2x1
jax: 0.10.0
libtpu: 0.0.40
codegen_flags: <defaults>
</compile_context>

<pallas_src>
import jax
import jax.numpy as jnp
from jax.experimental import pallas as pl
from jax.experimental.pallas import tpu as pltpu


def _round_up(v, mult):
    return ((v + mult - 1) // mult) * mult


def fm_kernel(x_ref, emb_ref, v2_ref, w_ref, b_ref, o_ref):
    """One batch tile of the FM forward.

    x_ref:   (TILE_M, n)  f32  -- tile of input rows (pipelined)
    emb_ref: (n, k_pad)   f32  -- embedding V (zero-padded along k), VMEM-resident
    v2_ref:  (n, 1)       f32  -- rowsum_k(V^2), precomputed in wrapper
    w_ref:   (n, 1)       f32  -- linear weight, transposed
    b_ref:   (1,)         f32  -- linear bias (SMEM scalar)
    o_ref:   (TILE_M, 1)  f32
    """
    x = x_ref[...]

    # out_1 = sum_k (x @ V)^2   -- the only (m,n,k) matmul left.
    xv = jnp.dot(x, emb_ref[...], preferred_element_type=jnp.float32)   # (TILE_M, k_pad)
    out_1 = jnp.sum(xv * xv, axis=-1, keepdims=True)                    # (TILE_M, 1)

    # out_2 = sum_k (x^2 @ V^2) == (x^2) @ rowsum_k(V^2): a single matvec.
    out_2 = jnp.dot(x * x, v2_ref[...], preferred_element_type=jnp.float32)

    # Linear term: x @ W^T (+ bias from SMEM).
    lin = jnp.dot(x, w_ref[...], preferred_element_type=jnp.float32)

    o_ref[...] = 0.5 * (out_1 - out_2) + lin + b_ref[0]


def fm_forward(x, embedding, lin_w, lin_b, *, tile_m=512):
    """FM forward. x: (m, n), embedding: (n, k), lin_w: (1, n), lin_b: (1,) -> (m, 1)."""
    m, n = x.shape
    k = embedding.shape[1]

    # Tile the batch dim; pad m to a tile multiple and k to a lane multiple.
    tile_m = min(tile_m, _round_up(m, 8))
    m_pad = _round_up(m, tile_m)
    k_pad = _round_up(k, 128)

    x_p = x if m_pad == m else jnp.pad(x, ((0, m_pad - m), (0, 0)))
    emb_p = embedding if k_pad == k else jnp.pad(embedding, ((0, 0), (0, k_pad - k)))

    # Precompute rowsum of V^2 (algebraic simplification of out_2); transpose W.
    v2sum = jnp.sum(embedding * embedding, axis=1, keepdims=True).astype(jnp.float32)
    w_t = lin_w.reshape(n, 1).astype(jnp.float32)
    b = lin_b.reshape(1).astype(jnp.float32)

    grid = (m_pad // tile_m,)

    # Generous VMEM budget: double-buffered x tile + resident V / aux columns + output.
    vmem_need = (2 * tile_m * n * 4 + 2 * n * k_pad * 4 +
                 4 * n * 128 * 4 + 2 * tile_m * 128 * 4 + (2 << 20))
    vmem_limit = int(min(max(vmem_need, 16 * 1024 * 1024), 64 * 1024 * 1024))

    cost = pl.CostEstimate(
        flops=int(2 * m_pad * n * k_pad + 6 * m_pad * n + 3 * m_pad * k_pad),
        transcendentals=0,
        bytes_accessed=int(4 * (m_pad * n + n * k_pad + 2 * n + m_pad)),
    )

    out = pl.pallas_call(
        fm_kernel,
        out_shape=jax.ShapeDtypeStruct((m_pad, 1), jnp.float32),
        grid_spec=pltpu.PrefetchScalarGridSpec(
            num_scalar_prefetch=0,
            grid=grid,
            in_specs=[
                pl.BlockSpec((tile_m, n), lambda i: (i, 0)),        # x tile (pipelined)
                pl.BlockSpec((n, k_pad), lambda i: (0, 0)),         # V (VMEM-resident)
                pl.BlockSpec((n, 1), lambda i: (0, 0)),             # rowsum_k(V^2)
                pl.BlockSpec((n, 1), lambda i: (0, 0)),             # linear weight^T
                pl.BlockSpec(memory_space=pltpu.MemorySpace.SMEM),  # bias scalar
            ],
            out_specs=pl.BlockSpec((tile_m, 1), lambda i: (i, 0)),
        ),
        compiler_params=pltpu.CompilerParams(
            dimension_semantics=("parallel",),
            vmem_limit_bytes=vmem_limit,
        ),
        cost_estimate=cost,
    )(x_p, emb_p, v2sum, w_t, b)

    return out[:m]


def fm_reference(x, embedding, lin_w, lin_b):
    """Pure-JAX reference matching the PyTorch forward."""
    out_1 = jnp.sum(jnp.einsum('mn,nk->mk', x, embedding) ** 2, axis=1, keepdims=True)
    out_2 = jnp.sum((x ** 2) @ (embedding ** 2), axis=1, keepdims=True)
    return 0.5 * (out_1 - out_2) + x @ lin_w.T + lin_b


# TODO(synk): train_batch (SGD + BCEWithLogitsLoss loop) is training logic, not
# part of the forward pass, and is intentionally not implemented as a kernel.

if __name__ == "__main__":
    key = jax.random.PRNGKey(0)

    def make_inputs(m, n, k, key):
        k_x, k_emb, k_w, k_b = jax.random.split(key, 4)
        x = jax.random.normal(k_x, (m, n), dtype=jnp.float32)
        emb = jax.random.normal(k_emb, (n, k), dtype=jnp.float32)       # torch.randn((n, k))
        lin_w = jax.random.normal(k_w, (1, n), dtype=jnp.float32) * 0.1  # nn.Linear(n,1).weight
        lin_b = jax.random.normal(k_b, (1,), dtype=jnp.float32) * 0.1    # nn.Linear(n,1).bias
        return x, emb, lin_w, lin_b

    # Case 1: small shapes implied by the forward (single tile).
    k1, k2 = jax.random.split(key)
    x, emb, lin_w, lin_b = make_inputs(8, 32, 16, k1)
    out = jax.block_until_ready(fm_forward(x, emb, lin_w, lin_b))
    ref = fm_reference(x, emb, lin_w, lin_b)
    assert out.shape == (8, 1)
    assert jnp.allclose(out, ref, atol=1e-3, rtol=1e-3), (out, ref)

    # Case 2: exercises multi-tile grid + tail-row padding (m not a tile multiple).
    x, emb, lin_w, lin_b = make_inputs(260, 64, 16, k2)
    out = jax.block_until_ready(fm_forward(x, emb, lin_w, lin_b, tile_m=128))
    ref = fm_reference(x, emb, lin_w, lin_b)
    assert out.shape == (260, 1)
    assert jnp.allclose(out, ref, atol=1e-3, rtol=1e-3), (out, ref)

    print("KERNEL_OK")
</pallas_src>

<mosaic_0001>
module attributes {stable_mosaic.version = 11 : i64} {
  func.func @fm_kernel(%arg0: i32, %arg1: memref<8x32xf32, #tpu.memory_space<vmem>>, %arg2: memref<32x128xf32, #tpu.memory_space<vmem>>, %arg3: memref<32x1xf32, #tpu.memory_space<vmem>>, %arg4: memref<32x1xf32, #tpu.memory_space<vmem>>, %arg5: memref<1xf32, #tpu.memory_space<smem>>, %arg6: memref<8x1xf32, #tpu.memory_space<vmem>>) attributes {dimension_semantics = [#tpu.dimension_semantics<parallel>], iteration_bounds = array<i64: 1>, scalar_prefetch = 0 : i64, scratch_operands = 0 : i64, tpu.core_type = #tpu.core_type<tc>, window_params = [{transform_indices = @transform_0, window_bounds = array<i64: 8, 32>}, {pipeline_mode = #tpu.pipeline_mode<synchronous>, transform_indices = @transform_1, window_bounds = array<i64: 32, 128>}, {pipeline_mode = #tpu.pipeline_mode<synchronous>, transform_indices = @transform_2, window_bounds = array<i64: 32, 1>}, {pipeline_mode = #tpu.pipeline_mode<synchronous>, transform_indices = @transform_3, window_bounds = array<i64: 32, 1>}, {transform_indices = @transform_4, window_bounds = array<i64: 1>}, {transform_indices = @transform_5, window_bounds = array<i64: 8, 1>}]} {
    %c0 = arith.constant 0 : index
    %c0_0 = arith.constant 0 : index
    %0 = vector.load %arg1[%c0, %c0_0] : memref<8x32xf32, #tpu.memory_space<vmem>>, vector<8x32xf32>
    %c0_1 = arith.constant 0 : index
    %c0_2 = arith.constant 0 : index
    %1 = vector.load %arg2[%c0_1, %c0_2] : memref<32x128xf32, #tpu.memory_space<vmem>>, vector<32x128xf32>
    %cst = arith.constant dense<0.000000e+00> : vector<8x128xf32>
    %2 = tpu.matmul %0, %1, %cst {dimension_numbers = #tpu.dot_dimension_numbers<[1], [0], [0], [1], [0, 0, 1, 1], [], []>} : vector<8x32xf32>, vector<32x128xf32>, vector<8x128xf32> -> vector<8x128xf32>
    %3 = arith.mulf %2, %2 : vector<8x128xf32>
    %cst_3 = arith.constant dense<0.000000e+00> : vector<8xf32>
    %4 = vector.multi_reduction <add>, %3, %cst_3 [1] : vector<8x128xf32> to vector<8xf32>
    %5 = vector.shape_cast %4 : vector<8xf32> to vector<8x1xf32>
    %6 = arith.mulf %0, %0 : vector<8x32xf32>
    %c0_4 = arith.constant 0 : index
    %c0_5 = arith.constant 0 : index
    %7 = vector.load %arg3[%c0_4, %c0_5] : memref<32x1xf32, #tpu.memory_space<vmem>>, vector<32x1xf32>
    %cst_6 = arith.constant dense<0.000000e+00> : vector<8x1xf32>
    %8 = tpu.matmul %6, %7, %cst_6 {dimension_numbers = #tpu.dot_dimension_numbers<[1], [0], [0], [1], [0, 0, 1, 1], [], []>} : vector<8x32xf32>, vector<32x1xf32>, vector<8x1xf32> -> vector<8x1xf32>
    %c0_7 = arith.constant 0 : index
    %c0_8 = arith.constant 0 : index
    %9 = vector.load %arg4[%c0_7, %c0_8] : memref<32x1xf32, #tpu.memory_space<vmem>>, vector<32x1xf32>
    %cst_9 = arith.constant dense<0.000000e+00> : vector<8x1xf32>
    %10 = tpu.matmul %0, %9, %cst_9 {dimension_numbers = #tpu.dot_dimension_numbers<[1], [0], [0], [1], [0, 0, 1, 1], [], []>} : vector<8x32xf32>, vector<32x1xf32>, vector<8x1xf32> -> vector<8x1xf32>
    %11 = arith.subf %5, %8 : vector<8x1xf32>
    %cst_10 = arith.constant 5.000000e-01 : f32
    %12 = vector.broadcast %cst_10 : f32 to vector<8x1xf32>
    %13 = arith.mulf %12, %11 : vector<8x1xf32>
    %14 = arith.addf %13, %10 : vector<8x1xf32>
    %c0_11 = arith.constant 0 : index
    %15 = memref.load %arg5[%c0_11] : memref<1xf32, #tpu.memory_space<smem>>
    %16 = vector.broadcast %15 : f32 to vector<8x1xf32>
    %17 = arith.addf %14, %16 : vector<8x1xf32>
    %c0_12 = arith.constant 0 : index
    %c0_13 = arith.constant 0 : index
    %18 = vector.load %arg6[%c0_12, %c0_13] : memref<8x1xf32, #tpu.memory_space<vmem>>, vector<8x1xf32>
    tpu.vector_store %arg6[%c0_12, %c0_13], %17 {strides = array<i32>} : memref<8x1xf32, #tpu.memory_space<vmem>>, vector<8x1xf32>,
    return
  }
  func.func @transform_0(%arg0: i32) -> (i32, i32) {
    %c0_i32 = arith.constant 0 : i32
    %c0_i32_0 = arith.constant 0 : i32
    return %arg0, %c0_i32 : i32, i32
  }
  func.func @transform_1(%arg0: i32) -> (i32, i32) {
    %c0_i32 = arith.constant 0 : i32
    %c0_i32_0 = arith.constant 0 : i32
    %c0_i32_1 = arith.constant 0 : i32
    return %c0_i32, %c0_i32_0 : i32, i32
  }
  func.func @transform_2(%arg0: i32) -> (i32, i32) {
    %c0_i32 = arith.constant 0 : i32
    %c0_i32_0 = arith.constant 0 : i32
    %c0_i32_1 = arith.constant 0 : i32
    return %c0_i32, %c0_i32_0 : i32, i32
  }
  func.func @transform_3(%arg0: i32) -> (i32, i32) {
    %c0_i32 = arith.constant 0 : i32
    %c0_i32_0 = arith.constant 0 : i32
    %c0_i32_1 = arith.constant 0 : i32
    return %c0_i32, %c0_i32_0 : i32, i32
  }
  func.func @transform_4(%arg0: i32) -> i32 {
    %c0_i32 = arith.constant 0 : i32
    %c0_i32_0 = arith.constant 0 : i32
    return %c0_i32 : i32
  }
  func.func @transform_5(%arg0: i32) -> (i32, i32) {
    %c0_i32 = arith.constant 0 : i32
    %c0_i32_0 = arith.constant 0 : i32
    return %arg0, %c0_i32 : i32, i32
  }
}

</mosaic_0001>

<llo_original>
// kernel: tpu_custom_call.1
$region0: #{tpu_custom_call.1}
  #allocation0 [shape = 'u32[]', space=smem, size = 0x4, offset = 0x4, fixed_abs, tag = 'smem constant byte address 0x4 - core index']
  #allocation1 [shape = 'u32[144,128]{1,0:T(1,128)}', space=vmem, size = 0x12000, scoped, tag = 'internal scratch']
  #allocation2 [shape = 'f32[1]{0:T(128)S(6)}', space=smem, size = 0x200, scoped, tag = 'scoped memory for tpu_custom_call.1']
  %s0 = inlined_call_operand.vmem [shape: f32[8,32], index: 0, kind: input, shape index: {}]
  %s1 = inlined_call_operand.vmem [shape: f32[32,128], index: 1, kind: input, shape index: {}]
  %s2 = inlined_call_operand.vmem [shape: f32[32,1], index: 2, kind: input, shape index: {}]
  %s3 = inlined_call_operand.vmem [shape: f32[32,1], index: 3, kind: input, shape index: {}]
  %s4 = inlined_call_operand.<no memory space> [shape: f32[1], index: 4, kind: input, shape index: {}]
  %s5 = inlined_call_operand.vmem [shape: f32[8,1], index: 5, kind: output, shape index: {}]
  %s6 = sld [smem:[#allocation0]]
  $region30: #{tpu_custom_call.1} parent=0
    _
  %s8 = ssub.s32 1, %s6
  %s9 = scalar_select 0, %s8, %s6
  %10 = sst [smem:[#allocation2]] %s4
  // Predicated region
  $region2: #{tpu_custom_call.1} parent=0 // pred_check
    _
  $region3: #{tpu_custom_call.1} parent=0 // pred_check_branch
    %12 = sbr.rel (0) target = $region5
  $region4: #{tpu_custom_call.1} parent=0 // pred_region
    _
  $region5: #{tpu_custom_call.1} parent=0 // pred_fallthru
    _
  // Predicated region
  $region6: #{tpu_custom_call.1} parent=0 // pred_check
    _
  $region7: #{tpu_custom_call.1} parent=0 // pred_check_branch
    %14 = sbr.rel (0) target = $region9
  $region8: #{tpu_custom_call.1} parent=0 // pred_region
    _
  $region9: #{tpu_custom_call.1} parent=0 // pred_fallthru
    _
  // Predicated region
  $region10: #{tpu_custom_call.1} parent=0 // pred_check
    _
  $region11: #{tpu_custom_call.1} parent=0 // pred_check_branch
    %16 = sbr.rel (0) target = $region13
  $region12: #{tpu_custom_call.1} parent=0 // pred_region
    _
  $region13: #{tpu_custom_call.1} parent=0 // pred_fallthru
    _
  // Predicated region
  $region14: #{tpu_custom_call.1} parent=0 // pred_check
    _
  $region15: #{tpu_custom_call.1} parent=0 // pred_check_branch
    %18 = sbr.rel (0) target = $region17
  $region16: #{tpu_custom_call.1} parent=0 // pred_region
    _
  $region17: #{tpu_custom_call.1} parent=0 // pred_fallthru
    _
  // Predicated region
  $region18: #{tpu_custom_call.1} parent=0 // pred_check
    _
  $region19: #{tpu_custom_call.1} parent=0 // pred_check_branch
    %20 = sbr.rel (0) target = $region21
  $region20: #{tpu_custom_call.1} parent=0 // pred_region
    _
  $region21: #{tpu_custom_call.1} parent=0 // pred_fallthru
    _
  %v21 = vld [vmem:[%s0] sm:$0xff]
  %v22 = vld [vmem:[%s1] sm:$0xff]
  %v23 = vld [vmem:[%s1 + $0x8] sm:$0xff]
  %v24 = vld [vmem:[%s1 + $0x10] sm:$0xff]
  %v25 = vld [vmem:[%s1 + $0x18] sm:$0xff]
  %vm26 = vcmask 261120
  %v28 = vsel %vm26, %v21, 0
  %30 = vmatprep.subr.mxu0 0.0
  %31 = vmatpush1.msra.mxu0 %v22
  %32 = vmatprep.subr.mxu0 0.0
  %33 = vmatpush1.msra.mxu0 %v23
  %34 = vmatprep.subr.mxu0 0.0
  %35 = vmatpush1.msra.mxu0 %v24
  %36 = vmatprep.subr.mxu0 0.0
  %37 = vmatpush1.msra.mxu0 %v25
  %38 = vmatprep.subr.mxu0 0.0
  %39 = vmatpush1.msra.mxu0 0.0
  %40 = vmatprep.subr.mxu0 0.0
  %41 = vmatpush1.msra.mxu0 0.0
  %42 = vmatprep.subr.mxu0 0.0
  %43 = vmatpush1.msra.mxu0 0.0
  %44 = vmatprep.subr.mxu0 0.0
  %45 = vmatpush1.msra.mxu0 0.0
  %46 = vmatprep.subr.mxu0 0.0
  %47 = vmatpush1.msra.mxu0 0.0
  %48 = vmatprep.subr.mxu0 0.0
  %49 = vmatpush1.msra.mxu0 0.0
  %50 = vmatprep.subr.mxu0 0.0
  %51 = vmatpush1.msra.mxu0 0.0
  %52 = vmatprep.subr.mxu0 0.0
  %53 = vmatpush1.msra.mxu0 0.0
  %54 = vmatprep.subr.mxu0 0.0
  %55 = vmatpush1.msra.mxu0 0.0
  %56 = vmatprep.subr.mxu0 0.0
  %57 = vmatpush1.msra.mxu0 0.0
  %58 = vmatprep.subr.mxu0 0.0
  %59 = vmatpush1.msra.mxu0 0.0
  %60 = vmatprep.subr.mxu0 0.0
  %61 = vmatpush1.msra.mxu0 0.0
  %62 = vmatprep.subr.mxu0 0.0
  %63 = vmatpush1.msra.mxu0 0.0
  %64 = vmatprep.subr.mxu0 0.0
  %65 = vmatpush1.msra.mxu0 0.0
  %66 = vmatprep.subr.mxu0 0.0
  %67 = vmatpush1.msra.mxu0 0.0
  %68 = vmatprep.subr.mxu0 0.0
  %69 = vmatpush1.msra.mxu0 0.0
  %70 = vmatprep.subr.mxu0 0.0
  %71 = vmatpush1.msra.mxu0 0.0
  %72 = vmatprep.subr.mxu0 0.0
  %73 = vmatpush1.msra.mxu0 0.0
  %74 = vmatprep.subr.mxu0 0.0
  %75 = vmatpush1.msra.mxu0 0.0
  %76 = vmatprep.subr.mxu0 0.0
  %77 = vmatpush1.msra.mxu0 0.0
  %78 = vmatprep.subr.mxu0 0.0
  %79 = vmatpush1.msra.mxu0 0.0
  %80 = vmatprep.subr.mxu0 0.0
  %81 = vmatpush1.msra.mxu0 0.0
  %82 = vmatprep.subr.mxu0 0.0
  %83 = vmatpush1.msra.mxu0 0.0
  %84 = vmatprep.subr.mxu0 0.0
  %85 = vmatpush1.msra.mxu0 0.0
  %86 = vmatprep.subr.mxu0 0.0
  %87 = vmatpush1.msra.mxu0 0.0
  %88 = vmatprep.subr.mxu0 0.0
  %89 = vmatpush1.msra.mxu0 0.0
  %90 = vmatprep.subr.mxu0 0.0
  %91 = vmatpush1.msra.mxu0 0.0
  %92 = vmatprep.subr.mxu0 0.0
  %93 = vmatpush1.msra.mxu0 0.0
  %94 = vmatprep.mubr.f32.mxu0 0.0
  %95 = vmatmul.mubr.f32.gmra.mrb[0].mxu0 %v28
  %v96 = vpop.f32.mrb[0].mxu0
  %v97 = vadd.f32 0.0, %v96
  %v98 = vpop.f32.mrb[0].mxu0
  %99 = vdwg.mxu0
  %v100 = vmul.f32 %v97, %v97
  %101 = vadd.xlane.f32.xlu0 %v100
  %v102 = vpop.xlane.xlu0 %101
  %v103 = vmul.f32 %v21, %v21
  %v104 = vld [vmem:[%s2] sm:$0xff]
  %v105 = vld [vmem:[%s2 + $0x8] sm:$0xff]
  %v106 = vld [vmem:[%s2 + $0x10] sm:$0xff]
  %v107 = vld [vmem:[%s2 + $0x18] sm:$0xff]
  %v109 = vsel %vm26, %v103, 0
  %111 = vmatprep.subr.mxu0 0.0
  %112 = vmatpush1.msra.mxu0 %v104
  %113 = vmatprep.subr.mxu0 0.0
  %114 = vmatpush1.msra.mxu0 %v105
  %115 = vmatprep.subr.mxu0 0.0
  %116 = vmatpush1.msra.mxu0 %v106
  %117 = vmatprep.subr.mxu0 0.0
  %118 = vmatpush1.msra.mxu0 %v107
  %119 = vmatprep.subr.mxu0 0.0
  %120 = vmatpush1.msra.mxu0 0.0
  %121 = vmatprep.subr.mxu0 0.0
  %122 = vmatpush1.msra.mxu0 0.0
  %123 = vmatprep.subr.mxu0 0.0
  %124 = vmatpush1.msra.mxu0 0.0
  %125 = vmatprep.subr.mxu0 0.0
  %126 = vmatpush1.msra.mxu0 0.0
  %127 = vmatprep.subr.mxu0 0.0
  %128 = vmatpush1.msra.mxu0 0.0
  %129 = vmatprep.subr.mxu0 0.0
  %130 = vmatpush1.msra.mxu0 0.0
  %131 = vmatprep.subr.mxu0 0.0
  %132 = vmatpush1.msra.mxu0 0.0
  %133 = vmatprep.subr.mxu0 0.0
  %134 = vmatpush1.msra.mxu0 0.0
  %135 = vmatprep.subr.mxu0 0.0
  %136 = vmatpush1.msra.mxu0 0.0
  %137 = vmatprep.subr.mxu0 0.0
  %138 = vmatpush1.msra.mxu0 0.0
  %139 = vmatprep.subr.mxu0 0.0
  %140 = vmatpush1.msra.mxu0 0.0
  %141 = vmatprep.subr.mxu0 0.0
  %142 = vmatpush1.msra.mxu0 0.0
  %143 = vmatprep.subr.mxu0 0.0
  %144 = vmatpush1.msra.mxu0 0.0
  %145 = vmatprep.subr.mxu0 0.0
  %146 = vmatpush1.msra.mxu0 0.0
  %147 = vmatprep.subr.mxu0 0.0
  %148 = vmatpush1.msra.mxu0 0.0
  %149 = vmatprep.subr.mxu0 0.0
  %150 = vmatpush1.msra.mxu0 0.0
  %151 = vmatprep.subr.mxu0 0.0
  %152 = vmatpush1.msra.mxu0 0.0
  %153 = vmatprep.subr.mxu0 0.0
  %154 = vmatpush1.msra.mxu0 0.0
  %155 = vmatprep.subr.mxu0 0.0
  %156 = vmatpush1.msra.mxu0 0.0
  %157 = vmatprep.subr.mxu0 0.0
  %158 = vmatpush1.msra.mxu0 0.0
  %159 = vmatprep.subr.mxu0 0.0
  %160 = vmatpush1.msra.mxu0 0.0
  %161 = vmatprep.subr.mxu0 0.0
  %162 = vmatpush1.msra.mxu0 0.0
  %163 = vmatprep.subr.mxu0 0.0
  %164 = vmatpush1.msra.mxu0 0.0
  %165 = vmatprep.subr.mxu0 0.0
  %166 = vmatpush1.msra.mxu0 0.0
  %167 = vmatprep.subr.mxu0 0.0
  %168 = vmatpush1.msra.mxu0 0.0
  %169 = vmatprep.subr.mxu0 0.0
  %170 = vmatpush1.msra.mxu0 0.0
  %171 = vmatprep.subr.mxu0 0.0
  %172 = vmatpush1.msra.mxu0 0.0
  %173 = vmatprep.subr.mxu0 0.0
  %174 = vmatpush1.msra.mxu0 0.0
  %175 = vmatprep.mubr.f32.mxu0 0.0
  %176 = vmatmul.mubr.f32.gmra.mrb[0].mxu0 %v109
  %v177 = vpop.f32.mrb[0].mxu0
  %v178 = vadd.f32 0.0, %v177
  %v179 = vpop.f32.mrb[0].mxu0
  %180 = vdwg.mxu0
  %v181 = vld [vmem:[%s3] sm:$0xff]
  %v182 = vld [vmem:[%s3 + $0x8] sm:$0xff]
  %v183 = vld [vmem:[%s3 + $0x10] sm:$0xff]
  %v184 = vld [vmem:[%s3 + $0x18] sm:$0xff]
  %185 = vmatprep.subr.mxu0 0.0
  %186 = vmatpush1.msra.mxu0 %v181
  %187 = vmatprep.subr.mxu0 0.0
  %188 = vmatpush1.msra.mxu0 %v182
  %189 = vmatprep.subr.mxu0 0.0
  %190 = vmatpush1.msra.mxu0 %v183
  %191 = vmatprep.subr.mxu0 0.0
  %192 = vmatpush1.msra.mxu0 %v184
  %193 = vmatprep.subr.mxu0 0.0
  %194 = vmatpush1.msra.mxu0 0.0
  %195 = vmatprep.subr.mxu0 0.0
  %196 = vmatpush1.msra.mxu0 0.0
  %197 = vmatprep.subr.mxu0 0.0
  %198 = vmatpush1.msra.mxu0 0.0
  %199 = vmatprep.subr.mxu0 0.0
  %200 = vmatpush1.msra.mxu0 0.0
  %201 = vmatprep.subr.mxu0 0.0
  %202 = vmatpush1.msra.mxu0 0.0
  %203 = vmatprep.subr.mxu0 0.0
  %204 = vmatpush1.msra.mxu0 0.0
  %205 = vmatprep.subr.mxu0 0.0
  %206 = vmatpush1.msra.mxu0 0.0
  %207 = vmatprep.subr.mxu0 0.0
  %208 = vmatpush1.msra.mxu0 0.0
  %209 = vmatprep.subr.mxu0 0.0
  %210 = vmatpush1.msra.mxu0 0.0
  %211 = vmatprep.subr.mxu0 0.0
  %212 = vmatpush1.msra.mxu0 0.0
  %213 = vmatprep.subr.mxu0 0.0
  %214 = vmatpush1.msra.mxu0 0.0
  %215 = vmatprep.subr.mxu0 0.0
  %216 = vmatpush1.msra.mxu0 0.0
  %217 = vmatprep.subr.mxu0 0.0
  %218 = vmatpush1.msra.mxu0 0.0
  %219 = vmatprep.subr.mxu0 0.0
  %220 = vmatpush1.msra.mxu0 0.0
  %221 = vmatprep.subr.mxu0 0.0
  %222 = vmatpush1.msra.mxu0 0.0
  %223 = vmatprep.subr.mxu0 0.0
  %224 = vmatpush1.msra.mxu0 0.0
  %225 = vmatprep.subr.mxu0 0.0
  %226 = vmatpush1.msra.mxu0 0.0
  %227 = vmatprep.subr.mxu0 0.0
  %228 = vmatpush1.msra.mxu0 0.0
  %229 = vmatprep.subr.mxu0 0.0
  %230 = vmatpush1.msra.mxu0 0.0
  %231 = vmatprep.subr.mxu0 0.0
  %232 = vmatpush1.msra.mxu0 0.0
  %233 = vmatprep.subr.mxu0 0.0
  %234 = vmatpush1.msra.mxu0 0.0
  %235 = vmatprep.subr.mxu0 0.0
  %236 = vmatpush1.msra.mxu0 0.0
  %237 = vmatprep.subr.mxu0 0.0
  %238 = vmatpush1.msra.mxu0 0.0
  %239 = vmatprep.subr.mxu0 0.0
  %240 = vmatpush1.msra.mxu0 0.0
  %241 = vmatprep.subr.mxu0 0.0
  %242 = vmatpush1.msra.mxu0 0.0
  %243 = vmatprep.subr.mxu0 0.0
  %244 = vmatpush1.msra.mxu0 0.0
  %245 = vmatprep.subr.mxu0 0.0
  %246 = vmatpush1.msra.mxu0 0.0
  %247 = vmatprep.subr.mxu0 0.0
  %248 = vmatpush1.msra.mxu0 0.0
  %249 = vmatprep.mubr.f32.mxu0 0.0
  %250 = vmatmul.mubr.f32.gmra.mrb[0].mxu0 %v28
  %v251 = vpop.f32.mrb[0].mxu0
  %v252 = vadd.f32 0.0, %v251
  %v253 = vpop.f32.mrb[0].mxu0
  %254 = vdwg.mxu0
  %v255 = vsub.f32 %v102, %v178
  %v256 = vmul.f32 %v255, 0.5
  %v257 = vadd.f32 %v256, %v252
  %s258 = sld [smem:[#allocation2]]
  %v259 = vstv %s258
  %v260 = vadd.f32 %v257, %v259
  %vm261 = vcmask 7168
  %262 = vst.msk [vmem:[%s5] sm:$0xff] %vm261, %v260
  // Predicated region
  $region22: #{tpu_custom_call.1} parent=0 // pred_check
    _
  $region23: #{tpu_custom_call.1} parent=0 // pred_check_branch
    %264 = sbr.rel (0) target = $region25
  $region24: #{tpu_custom_call.1} parent=0 // pred_region
    _
  $region25: #{tpu_custom_call.1} parent=0 // pred_fallthru
    _
  // Predicated region
  $region26: #{tpu_custom_call.1} parent=0 // pred_check
    _
  $region27: #{tpu_custom_call.1} parent=0 // pred_check_branch
    %266 = sbr.rel (0) target = $region29
  $region28: #{tpu_custom_call.1} parent=0 // pred_region
    _
  $region29: #{tpu_custom_call.1} parent=0 // pred_fallthru
    _

</llo_original>
